<compile_context>
chip_gen: v7x
topology: tpu7x:2x2x1
jax: 0.10.0
libtpu: 0.0.40
codegen_flags: <defaults>
</compile_context>

<pallas_src>
import jax
import jax.numpy as jnp
from jax.experimental import pallas as pl
from jax.experimental.pallas import tpu as pltpu

INV_LN2 = 1.4426950408889634  # 1 / ln(2), for log2


def _sum_all(x):
    # full reduction kept 2D: (R, C) -> (1, 1)
    return jnp.sum(jnp.sum(x, axis=1, keepdims=True), axis=0, keepdims=True)


def toy_kernel(tags_ref, px_ref, mi_ref):
    tags = tags_ref[...]          # (T, 4) f32
    px = px_ref[...]              # (1, 4) f32

    # softmax over the tag axis (dim 0); reciprocal hoisted out of the divide
    m = jnp.max(tags, axis=0, keepdims=True)                   # (1, 4)
    e = jnp.exp(tags - m)                                      # (T, 4)  EUP
    inv_denom = 1.0 / jnp.sum(e, axis=0, keepdims=True)        # (1, 4)
    pzgivenx = e * inv_denom                                   # (T, 4)

    # joint and z-marginal
    pzx = pzgivenx * px                                        # (T, 4) == einsum('ji,i->ji')
    pz = jnp.sum(pzx, axis=1, keepdims=True)                   # (T, 1) == pzgivenx.mv(px)
    inv_pz = 1.0 / pz                                          # reused by both MI terms

    # mi_zx: pzx / outer(pz, px) == pzgivenx / pz  (px cancels; pzpx never built)
    mi_zx = _sum_all(pzx * (jnp.log(pzgivenx * inv_pz) * INV_LN2))       # (1, 1)

    # py marginal split into its two scalars (no (1,2) concat needed)
    py0 = jnp.sum(px[:, 0:2], axis=1, keepdims=True)           # (1, 1)
    py1 = jnp.sum(px[:, 2:4], axis=1, keepdims=True)           # (1, 1)
    inv_py0 = 1.0 / py0
    inv_py1 = 1.0 / py1

    # pyz columns as independent (T, 1) column sums (no (T,2) concat needed)
    s0 = jnp.sum(pzx[:, 0:2], axis=1, keepdims=True)           # (T, 1) = pyz[:, 0]
    s1 = jnp.sum(pzx[:, 2:4], axis=1, keepdims=True)           # (T, 1) = pyz[:, 1]

    # mi_yz: pyz / outer(pz, py) == pyz * inv_pz * inv_py, per y-column
    mi_yz = (_sum_all(s0 * (jnp.log(s0 * inv_pz * inv_py0) * INV_LN2))
             + _sum_all(s1 * (jnp.log(s1 * inv_pz * inv_py1) * INV_LN2)))  # (1, 1)

    # single packed output row: [mi_yz, mi_zx]
    mi_ref[...] = jnp.concatenate([mi_yz, mi_zx], axis=1)      # (1, 2)


def toy_forward(tags, px, lam):
    """Pallas-backed equivalent of Toy.forward(px, lam)."""
    tags = tags.astype(jnp.float32)
    px_row = px.reshape(1, 4).astype(jnp.float32)

    mi = pl.pallas_call(
        toy_kernel,
        out_shape=jax.ShapeDtypeStruct((1, 2), jnp.float32),
        in_specs=[
            pl.BlockSpec(memory_space=pltpu.MemorySpace.VMEM),  # tags (T, 4)
            pl.BlockSpec(memory_space=pltpu.MemorySpace.VMEM),  # px   (1, 4)
        ],
        out_specs=pl.BlockSpec(memory_space=pltpu.MemorySpace.VMEM),
    )(tags, px_row)

    mi_yz = mi[0, 0]
    mi_zx = mi[0, 1]
    # objective assembled in the wrapper (cheap scalar math; lam never enters the kernel)
    obj = -mi_yz + jnp.asarray(lam, dtype=jnp.float32) * mi_zx
    return obj, mi_yz, mi_zx


def toy_forward_ref(tags, px, lam):
    """Pure-JAX reference matching the PyTorch module exactly."""
    pzgivenx = jax.nn.softmax(tags, axis=0)
    pz = pzgivenx @ px
    pzx = pzgivenx * px[None, :]
    pzpx = jnp.outer(pz, px)
    py = jnp.array([px[:2].sum(), px[2:].sum()], dtype=jnp.float32)
    pyz = jnp.stack([pzx[:, :2].sum(axis=1), pzx[:, 2:].sum(axis=1)]).T
    pypz = jnp.outer(pz, py)
    mi_zx = jnp.sum(pzx * jnp.log2(pzx / pzpx))
    mi_yz = jnp.sum(pyz * jnp.log2(pyz / pypz))
    return (-mi_yz + lam * mi_zx, mi_yz, mi_zx)


if __name__ == "__main__":
    TAG_SIZE = 8  # small, consistent with the module (tags: (tag_size, 4))

    key = jax.random.PRNGKey(0)
    k_tags, k_px = jax.random.split(key)

    # Deterministic parameter init mimicking torch.rand(tag_size, 4)
    tags = jax.random.uniform(k_tags, (TAG_SIZE, 4), dtype=jnp.float32)

    # px: a probability vector over 4 states (positive, sums to 1)
    px_raw = jax.random.uniform(k_px, (4,), dtype=jnp.float32) + 0.1
    px = px_raw / px_raw.sum()
    lam = 0.5

    obj, mi_yz, mi_zx = toy_forward(tags, px, lam)
    jax.block_until_ready((obj, mi_yz, mi_zx))

    # sanity-check against the pure-JAX reference
    obj_r, mi_yz_r, mi_zx_r = toy_forward_ref(tags, px, lam)
    assert jnp.allclose(obj, obj_r, rtol=1e-5, atol=1e-6), (obj, obj_r)
    assert jnp.allclose(mi_yz, mi_yz_r, rtol=1e-5, atol=1e-6), (mi_yz, mi_yz_r)
    assert jnp.allclose(mi_zx, mi_zx_r, rtol=1e-5, atol=1e-6), (mi_zx, mi_zx_r)

    print("KERNEL_OK")
</pallas_src>

<mosaic_0001>
module attributes {stable_mosaic.version = 11 : i64} {
  func.func @toy_kernel(%arg0: memref<8x4xf32, #tpu.memory_space<vmem>>, %arg1: memref<1x4xf32, #tpu.memory_space<vmem>>, %arg2: memref<1x2xf32, #tpu.memory_space<vmem>>) attributes {dimension_semantics = [], scalar_prefetch = 0 : i64, scratch_operands = 0 : i64, tpu.core_type = #tpu.core_type<tc>} {
    %c0 = arith.constant 0 : index
    %c0_0 = arith.constant 0 : index
    %0 = vector.load %arg0[%c0, %c0_0] : memref<8x4xf32, #tpu.memory_space<vmem>>, vector<8x4xf32>
    %c0_1 = arith.constant 0 : index
    %c0_2 = arith.constant 0 : index
    %1 = vector.load %arg1[%c0_1, %c0_2] : memref<1x4xf32, #tpu.memory_space<vmem>>, vector<1x4xf32>
    %cst = arith.constant dense<0xFF800000> : vector<4xf32>
    %2 = vector.multi_reduction <maximumf>, %0, %cst [0] : vector<8x4xf32> to vector<4xf32>
    %3 = vector.shape_cast %2 : vector<4xf32> to vector<1x4xf32>
    %4 = vector.broadcast %3 : vector<1x4xf32> to vector<8x4xf32>
    %5 = arith.subf %0, %4 : vector<8x4xf32>
    %6 = math.exp %5 : vector<8x4xf32>
    %cst_3 = arith.constant dense<0.000000e+00> : vector<4xf32>
    %7 = vector.multi_reduction <add>, %6, %cst_3 [0] : vector<8x4xf32> to vector<4xf32>
    %8 = vector.shape_cast %7 : vector<4xf32> to vector<1x4xf32>
    %cst_4 = arith.constant 1.000000e+00 : f32
    %9 = vector.broadcast %cst_4 : f32 to vector<1x4xf32>
    %10 = arith.divf %9, %8 : vector<1x4xf32>
    %11 = vector.broadcast %10 : vector<1x4xf32> to vector<8x4xf32>
    %12 = arith.mulf %6, %11 : vector<8x4xf32>
    %13 = vector.broadcast %1 : vector<1x4xf32> to vector<8x4xf32>
    %14 = arith.mulf %12, %13 : vector<8x4xf32>
    %cst_5 = arith.constant dense<0.000000e+00> : vector<8xf32>
    %15 = vector.multi_reduction <add>, %14, %cst_5 [1] : vector<8x4xf32> to vector<8xf32>
    %16 = vector.shape_cast %15 : vector<8xf32> to vector<8x1xf32>
    %cst_6 = arith.constant 1.000000e+00 : f32
    %17 = vector.broadcast %cst_6 : f32 to vector<8x1xf32>
    %18 = arith.divf %17, %16 : vector<8x1xf32>
    %19 = vector.broadcast %18 : vector<8x1xf32> to vector<8x4xf32>
    %20 = arith.mulf %12, %19 : vector<8x4xf32>
    %21 = math.log %20 : vector<8x4xf32>
    %cst_7 = arith.constant 1.44269502 : f32
    %22 = vector.broadcast %cst_7 : f32 to vector<8x4xf32>
    %23 = arith.mulf %21, %22 : vector<8x4xf32>
    %24 = arith.mulf %14, %23 : vector<8x4xf32>
    %cst_8 = arith.constant dense<0.000000e+00> : vector<8xf32>
    %25 = vector.multi_reduction <add>, %24, %cst_8 [1] : vector<8x4xf32> to vector<8xf32>
    %26 = vector.shape_cast %25 : vector<8xf32> to vector<8x1xf32>
    %cst_9 = arith.constant dense<0.000000e+00> : vector<1xf32>
    %27 = vector.multi_reduction <add>, %26, %cst_9 [0] : vector<8x1xf32> to vector<1xf32>
    %28 = vector.shape_cast %27 : vector<1xf32> to vector<1x1xf32>
    %29 = vector.extract_strided_slice %1 {offsets = [0, 0], sizes = [1, 2], strides = [1, 1]} : vector<1x4xf32> to vector<1x2xf32>
    %cst_10 = arith.constant dense<0.000000e+00> : vector<1xf32>
    %30 = vector.multi_reduction <add>, %29, %cst_10 [1] : vector<1x2xf32> to vector<1xf32>
    %31 = vector.shape_cast %30 : vector<1xf32> to vector<1x1xf32>
    %32 = vector.extract_strided_slice %1 {offsets = [0, 2], sizes = [1, 2], strides = [1, 1]} : vector<1x4xf32> to vector<1x2xf32>
    %cst_11 = arith.constant dense<0.000000e+00> : vector<1xf32>
    %33 = vector.multi_reduction <add>, %32, %cst_11 [1] : vector<1x2xf32> to vector<1xf32>
    %34 = vector.shape_cast %33 : vector<1xf32> to vector<1x1xf32>
    %cst_12 = arith.constant 1.000000e+00 : f32
    %35 = vector.broadcast %cst_12 : f32 to vector<1x1xf32>
    %36 = arith.divf %35, %31 : vector<1x1xf32>
    %cst_13 = arith.constant 1.000000e+00 : f32
    %37 = vector.broadcast %cst_13 : f32 to vector<1x1xf32>
    %38 = arith.divf %37, %34 : vector<1x1xf32>
    %39 = vector.extract_strided_slice %14 {offsets = [0, 0], sizes = [8, 2], strides = [1, 1]} : vector<8x4xf32> to vector<8x2xf32>
    %cst_14 = arith.constant dense<0.000000e+00> : vector<8xf32>
    %40 = vector.multi_reduction <add>, %39, %cst_14 [1] : vector<8x2xf32> to vector<8xf32>
    %41 = vector.shape_cast %40 : vector<8xf32> to vector<8x1xf32>
    %42 = vector.extract_strided_slice %14 {offsets = [0, 2], sizes = [8, 2], strides = [1, 1]} : vector<8x4xf32> to vector<8x2xf32>
    %cst_15 = arith.constant dense<0.000000e+00> : vector<8xf32>
    %43 = vector.multi_reduction <add>, %42, %cst_15 [1] : vector<8x2xf32> to vector<8xf32>
    %44 = vector.shape_cast %43 : vector<8xf32> to vector<8x1xf32>
    %45 = arith.mulf %41, %18 : vector<8x1xf32>
    %46 = vector.broadcast %36 : vector<1x1xf32> to vector<8x1xf32>
    %47 = arith.mulf %45, %46 : vector<8x1xf32>
    %48 = math.log %47 : vector<8x1xf32>
    %cst_16 = arith.constant 1.44269502 : f32
    %49 = vector.broadcast %cst_16 : f32 to vector<8x1xf32>
    %50 = arith.mulf %48, %49 : vector<8x1xf32>
    %51 = arith.mulf %41, %50 : vector<8x1xf32>
    %cst_17 = arith.constant dense<0.000000e+00> : vector<8xf32>
    %52 = vector.multi_reduction <add>, %51, %cst_17 [1] : vector<8x1xf32> to vector<8xf32>
    %53 = vector.shape_cast %52 : vector<8xf32> to vector<8x1xf32>
    %cst_18 = arith.constant dense<0.000000e+00> : vector<1xf32>
    %54 = vector.multi_reduction <add>, %53, %cst_18 [0] : vector<8x1xf32> to vector<1xf32>
    %55 = vector.shape_cast %54 : vector<1xf32> to vector<1x1xf32>
    %56 = arith.mulf %44, %18 : vector<8x1xf32>
    %57 = vector.broadcast %38 : vector<1x1xf32> to vector<8x1xf32>
    %58 = arith.mulf %56, %57 : vector<8x1xf32>
    %59 = math.log %58 : vector<8x1xf32>
    %cst_19 = arith.constant 1.44269502 : f32
    %60 = vector.broadcast %cst_19 : f32 to vector<8x1xf32>
    %61 = arith.mulf %59, %60 : vector<8x1xf32>
    %62 = arith.mulf %44, %61 : vector<8x1xf32>
    %cst_20 = arith.constant dense<0.000000e+00> : vector<8xf32>
    %63 = vector.multi_reduction <add>, %62, %cst_20 [1] : vector<8x1xf32> to vector<8xf32>
    %64 = vector.shape_cast %63 : vector<8xf32> to vector<8x1xf32>
    %cst_21 = arith.constant dense<0.000000e+00> : vector<1xf32>
    %65 = vector.multi_reduction <add>, %64, %cst_21 [0] : vector<8x1xf32> to vector<1xf32>
    %66 = vector.shape_cast %65 : vector<1xf32> to vector<1x1xf32>
    %67 = arith.addf %55, %66 : vector<1x1xf32>
    %68 = tpu.concatenate %67, %28 in 1 : vector<1x1xf32>, vector<1x1xf32> -> vector<1x2xf32>
    %c0_22 = arith.constant 0 : index
    %c0_23 = arith.constant 0 : index
    %69 = vector.load %arg2[%c0_22, %c0_23] : memref<1x2xf32, #tpu.memory_space<vmem>>, vector<1x2xf32>
    tpu.vector_store %arg2[%c0_22, %c0_23], %68 {strides = array<i32>} : memref<1x2xf32, #tpu.memory_space<vmem>>, vector<1x2xf32>,
    return
  }
}

</mosaic_0001>

<llo_original>
// kernel: tpu_custom_call.1
$region0: #{tpu_custom_call.1}
  #allocation0 [shape = 'u32[]', space=smem, size = 0x4, offset = 0x4, fixed_abs, tag = 'smem constant byte address 0x4 - core index']
  #allocation1 [shape = 'u32[144,128]{1,0:T(1,128)}', space=vmem, size = 0x12000, scoped, tag = 'internal scratch']
  %s0 = inlined_call_operand.vmem [shape: f32[8,4], index: 0, kind: input, shape index: {}]
  %s1 = inlined_call_operand.vmem [shape: f32[1,4], index: 1, kind: input, shape index: {}]
  %s2 = inlined_call_operand.hbm [shape: f32[1,2], index: 2, kind: output, shape index: {}]
  %s3 = sld [smem:[#allocation0]]
  $region18: #{tpu_custom_call.1} parent=0
    _
  %s5 = ssub.s32 1, %s3
  %s6 = scalar_select 0, %s5, %s3
  $region1: #{tpu_custom_call.1} parent=0
    #allocation2 [shape = 'u8[512]{0}', space=vmem, size = 0x400, scoped, tag = 'output window, operand 0, single buffered']
    #allocation3 [shape = 's32[1]{0}', space=sflag, size = 0x4, scoped, tag = 'scoped memory for tpu_custom_call.1']
    %7 = vsyncpa [#allocation3], 0
    // Predicated region
    $region2: #{tpu_custom_call.1} parent=1 // pred_check
      _
    $region3: #{tpu_custom_call.1} parent=1 // pred_check_branch
      %9 = sbr.rel (0) target = $region5
    $region4: #{tpu_custom_call.1} parent=1 // pred_region
      _
    $region5: #{tpu_custom_call.1} parent=1 // pred_fallthru
      _
    // Predicated region
    $region6: #{tpu_custom_call.1} parent=1 // pred_check
      _
    $region7: #{tpu_custom_call.1} parent=1 // pred_check_branch
      %11 = sbr.rel (0) target = $region9
    $region8: #{tpu_custom_call.1} parent=1 // pred_region
      _
    $region9: #{tpu_custom_call.1} parent=1 // pred_fallthru
      _
    %v12 = vld [vmem:[%s0] sm:$0xff]
    %v13 = vld [vmem:[%s1] sm:$0x1]
    %vm14 = vcmask 31744
    %v15 = vsel %vm14, %v12, -inf
    %v16 = vrot.slane %v15, 4
    %v17 = vmax.f32 %v15, %v16
    %v18 = vrot.slane %v17, 2
    %v19 = vmax.f32 %v17, %v18
    %v20 = vrot.slane %v19, 1
    %v21 = vmax.f32 %v19, %v20
    %v22 = vsub.f32 %v12, %v21
    %v23 = vmul.f32 %v22, 1.442695
    %v24 = vpow.pop %v23
    %v25 = vsel %vm14, %v24, 0.0
    %v26 = vrot.slane %v25, 4
    %v27 = vadd.f32 %v25, %v26
    %v28 = vrot.slane %v27, 2
    %v29 = vadd.f32 %v27, %v28
    %v30 = vrot.slane %v29, 1
    %v31 = vadd.f32 %v29, %v30
    %v32 = vrcp.pop %v31
    %v33 = vmul.f32 1.0, %v32
    %v34 = vmul.f32 %v24, %v33
    %v36 = vlaneseq
    %v37 = vshrl.u32 %v36, 7
    %v38 = vsub.s32 0, %v37
    %v39 = vrot.slane %v13, %v38
    %v41 = vmul.f32 %v34, %v39
    %v42 = vsel %vm14, %v41, 0.0
    %43 = vadd.xlane.f32.xlu0 %v42
    %v44 = vpop.xlane.xlu0 %43
    %v45 = vrcp.pop %v44
    %v46 = vmul.f32 1.0, %v45
    %v47 = vmul.f32 %v34, %v46
    %v48 = vlog2.pop %v47
    %v49 = vmul.f32 %v48, 0.6931472
    %v50 = vmul.f32 %v49, 1.442695
    %v51 = vmul.f32 %v41, %v50
    %v52 = vsel %vm14, %v51, 0.0
    %53 = vadd.xlane.f32.xlu0 %v52
    %v54 = vpop.xlane.xlu0 %53
    %v55 = vrot.slane %v54, 4
    %v56 = vadd.f32 %v54, %v55
    %v57 = vrot.slane %v56, 2
    %v58 = vadd.f32 %v56, %v57
    %v59 = vrot.slane %v58, 1
    %v60 = vadd.f32 %v58, %v59
    %vm61 = vcmask 8192
    %v62 = vsel %vm61, %v13, 0.0
    %63 = vadd.xlane.f32.xlu0 %v62
    %v64 = vpop.xlane.xlu0 %63
    %65 = vrot.lane.b32.xlu0 %v39, 126
    %v66 = vpop.permute.xlu0 %65
    %v68 = vsel %vm61, %v66, 0.0
    %69 = vadd.xlane.f32.xlu0 %v68
    %v70 = vpop.xlane.xlu0 %69
    %v71 = vrcp.pop %v64
    %v72 = vmul.f32 1.0, %v71
    %v73 = vrcp.pop %v70
    %v74 = vmul.f32 1.0, %v73
    %vm75 = vcmask 15360
    %v76 = vsel %vm75, %v41, 0.0
    %77 = vadd.xlane.f32.xlu0 %v76
    %v78 = vpop.xlane.xlu0 %77
    %80 = vrot.lane.b32.xlu0 %v41, 126
    %v81 = vpop.permute.xlu0 %80
    %v83 = vsel %vm75, %v81, 0.0
    %84 = vadd.xlane.f32.xlu0 %v83
    %v85 = vpop.xlane.xlu0 %84
    %v86 = vmul.f32 %v78, %v46
    %v87 = vlaneseq
    %v88 = vshrl.u32 %v87, 7
    %v89 = vsub.s32 0, %v88
    %v90 = vrot.slane %v72, %v89
    %v91 = vmul.f32 %v86, %v90
    %v92 = vlog2.pop %v91
    %v93 = vmul.f32 %v92, 0.6931472
    %v94 = vmul.f32 %v93, 1.442695
    %v95 = vmul.f32 %v78, %v94
    %v96 = vadd.f32 %v95, 0.0
    %v97 = vrot.slane %v96, 4
    %v98 = vadd.f32 %v96, %v97
    %v99 = vrot.slane %v98, 2
    %v100 = vadd.f32 %v98, %v99
    %v101 = vrot.slane %v100, 1
    %v102 = vadd.f32 %v100, %v101
    %v103 = vmul.f32 %v85, %v46
    %v104 = vlaneseq
    %v105 = vshrl.u32 %v104, 7
    %v106 = vsub.s32 0, %v105
    %v107 = vrot.slane %v74, %v106
    %v108 = vmul.f32 %v103, %v107
    %v109 = vlog2.pop %v108
    %v110 = vmul.f32 %v109, 0.6931472
    %v111 = vmul.f32 %v110, 1.442695
    %v112 = vmul.f32 %v85, %v111
    %v113 = vadd.f32 %v112, 0.0
    %v114 = vrot.slane %v113, 4
    %v115 = vadd.f32 %v113, %v114
    %v116 = vrot.slane %v115, 2
    %v117 = vadd.f32 %v115, %v116
    %v118 = vrot.slane %v117, 1
    %v119 = vadd.f32 %v117, %v118
    %v120 = vadd.f32 %v102, %v119
    %vm121 = vcmask 7168
    %v122 = vsel %vm121, %v120, %v60
    %123 = vst.msk [vmem:[#allocation2] sm:$0x1] %vm61, %v122
    // Predicated region
    $region10: #{tpu_custom_call.1} parent=1 // pred_check
      _
    $region11: #{tpu_custom_call.1} parent=1 // pred_check_branch
      %125 = sbr.rel (0) target = $region13
    $region12: #{tpu_custom_call.1} parent=1 // pred_region
      %s127 = ssub.s32 16, 16
      %128 = vsyncadd [#allocation3], %s127
      %s130 = sshll.u32 [#allocation2], 4
      %s131 = int_to_ptr.vmem [resolvable:$true] %s130
      %133 = dma.vmem_to_hbm [thread:$0]  %s131, 16, %s2, [#allocation3]
    $region13: #{tpu_custom_call.1} parent=1 // pred_fallthru
      _
    // Predicated region
    $region14: #{tpu_custom_call.1} parent=1 // pred_check
      _
    $region15: #{tpu_custom_call.1} parent=1 // pred_check_branch
      %135 = sbr.rel (0) target = $region17
    $region16: #{tpu_custom_call.1} parent=1 // pred_region
      %136 = dma.done [#allocation3], 16
    $region17: #{tpu_custom_call.1} parent=1 // pred_fallthru
      _
    %137 = vsyncpa [#allocation3], 1

</llo_original>
